<compile_context>
chip_gen: v7x
topology: tpu7x:2x2x1
jax: 0.10.0
libtpu: 0.0.40
codegen_flags: <defaults>
</compile_context>

<pallas_src>
import jax
import jax.numpy as jnp
from jax.experimental import pallas as pl
from jax.experimental.pallas import tpu as pltpu

INPUT_DIM = 16
HIDDEN_DIM1 = 10
HIDDEN_DIM2 = 5
OUT_DIM = 1

LANES = 128                 # TPU lane width
GROUP = 16                  # lanes per packed sample (>= all layer widths)
PACK = LANES // GROUP       # 8 samples per 128-lane row

assert INPUT_DIM <= GROUP and HIDDEN_DIM1 <= GROUP and HIDDEN_DIM2 <= GROUP
assert PACK * INPUT_DIM == LANES   # makes the (batch,16)->(batch/8,128) reshape free

# bf16 weight-slab layout (row offsets, all 128-aligned):
_W1_ROW = 0                 # rows [0,128)    : block-diagonal fc1  (128,128)
_W2_ROW = LANES             # rows [128,256)  : block-diagonal fc2  (128,128)
_W3_ROW = 2 * LANES         # rows [256,384)  : fc3 scatter         (128,128), cols [0,8) used
SLAB_ROWS = 3 * LANES


def _mlp_kernel(x_ref, w_ref, bias_ref, b3_ref, o_ref):
    # x_ref: (TBp, 128) f32 -- 8 samples x 16 features per row.
    x = x_ref[...].astype(jnp.bfloat16)

    # fc1 + ReLU (block diagonal): sample j of a row lives in lanes [16j, 16j+16).
    w1 = w_ref[_W1_ROW:_W1_ROW + LANES, :]
    h1 = jnp.dot(x, w1, preferred_element_type=jnp.float32)
    h1 = jnp.maximum(h1 + bias_ref[0:1, :], 0.0).astype(jnp.bfloat16)

    # fc2 + ReLU (block diagonal); padded lanes stay exactly zero.
    w2 = w_ref[_W2_ROW:_W2_ROW + LANES, :]
    h2 = jnp.dot(h1, w2, preferred_element_type=jnp.float32)
    h2 = jnp.maximum(h2 + bias_ref[1:2, :], 0.0).astype(jnp.bfloat16)

    # fc3 scatter: output lane j (< 8) collects sample j's 5 hidden lanes.
    w3 = w_ref[_W3_ROW:_W3_ROW + LANES, :]
    y = jnp.dot(h2, w3, preferred_element_type=jnp.float32)
    o_ref[...] = (y + b3_ref[0]).astype(o_ref.dtype)


def pack_params(params):
    """Build block-diagonal bf16 weight slab, f32 bias rows and SMEM b3."""
    w1 = jnp.zeros((GROUP, GROUP), jnp.float32).at[:INPUT_DIM, :HIDDEN_DIM1].set(
        jnp.asarray(params["w1"], jnp.float32))
    w2 = jnp.zeros((GROUP, GROUP), jnp.float32).at[:HIDDEN_DIM1, :HIDDEN_DIM2].set(
        jnp.asarray(params["w2"], jnp.float32))
    eye = jnp.eye(PACK, dtype=jnp.float32)
    w1_bd = jnp.kron(eye, w1)                         # (128,128) block diagonal
    w2_bd = jnp.kron(eye, w2)

    w3_col = jnp.zeros((GROUP,), jnp.float32).at[:HIDDEN_DIM2].set(
        jnp.asarray(params["w3"], jnp.float32).reshape(-1))
    w3_sc = jnp.zeros((LANES, LANES), jnp.float32)
    for j in range(PACK):                             # group j -> output lane j
        w3_sc = w3_sc.at[j * GROUP:(j + 1) * GROUP, j].set(w3_col)

    w_slab = jnp.concatenate([w1_bd, w2_bd, w3_sc], axis=0).astype(jnp.bfloat16)

    b1 = jnp.zeros((GROUP,), jnp.float32).at[:HIDDEN_DIM1].set(
        jnp.asarray(params["b1"], jnp.float32).reshape(-1))
    b2 = jnp.zeros((GROUP,), jnp.float32).at[:HIDDEN_DIM2].set(
        jnp.asarray(params["b2"], jnp.float32).reshape(-1))
    biases = jnp.stack([jnp.tile(b1, PACK), jnp.tile(b2, PACK)])   # (2,128) f32
    b3 = jnp.asarray(params["b3"], jnp.float32).reshape(1)         # (1,) f32 -> SMEM
    return {"w_slab": w_slab, "biases": biases, "b3": b3}


def _choose_tiling(batch, tile_b):
    g = PACK * 16                        # 128-row granularity (packed blocks >= (16,128))
    padded_min = pl.cdiv(batch, g) * g
    n = pl.cdiv(padded_min, tile_b)
    if padded_min >= 2 * g:              # >=2 (even) blocks so both v7x TCs get work
        n = max(n, 2)
        n += n % 2
    tb = pl.cdiv(pl.cdiv(padded_min, n), g) * g
    return n, tb, n * tb


def regression_nn_forward(x, packed, *, tile_b=16384):
    """x: (batch, INPUT_DIM) f32; packed: pack_params output. Returns (batch, 1)."""
    batch = x.shape[0]
    n_blocks, tb, padded = _choose_tiling(batch, tile_b)
    if padded != batch:
        x = jnp.pad(x, ((0, padded - batch), (0, 0)))
    xp = x.reshape(padded // PACK, LANES)   # free reshape: 8 samples per 128-lane row
    tbp = tb // PACK

    flops = 2 * padded * (INPUT_DIM * HIDDEN_DIM1
                          + HIDDEN_DIM1 * HIDDEN_DIM2
                          + HIDDEN_DIM2 * OUT_DIM)
    bytes_accessed = (padded * INPUT_DIM * 4            # x read
                      + (padded // PACK) * LANES * 4    # lane-dense output write
                      + SLAB_ROWS * LANES * 2           # bf16 weight slab
                      + 2 * LANES * 4 + 4)              # biases + b3

    out = pl.pallas_call(
        _mlp_kernel,
        out_shape=jax.ShapeDtypeStruct((padded // PACK, LANES), jnp.float32),
        grid=(n_blocks,),
        in_specs=[
            pl.BlockSpec((tbp, LANES), lambda i: (i, 0)),        # pipelined x
            pl.BlockSpec((SLAB_ROWS, LANES), lambda i: (0, 0)),  # resident bf16 weights
            pl.BlockSpec((2, LANES), lambda i: (0, 0)),          # resident f32 biases
            pl.BlockSpec(memory_space=pltpu.MemorySpace.SMEM),   # b3 scalar
        ],
        out_specs=pl.BlockSpec((tbp, LANES), lambda i: (i, 0)),  # lane-dense output
        compiler_params=pltpu.CompilerParams(
            dimension_semantics=("parallel",),   # dual-TC sharding on v7x
            vmem_limit_bytes=32 * 1024 * 1024,
        ),
        cost_estimate=pl.CostEstimate(
            flops=flops, transcendentals=0, bytes_accessed=bytes_accessed),
    )(xp, packed["w_slab"], packed["biases"], packed["b3"])

    # Lanes 0..7 of each packed row are the 8 sample outputs, in order.
    return out[:, :PACK].reshape(padded)[:batch].reshape(batch, OUT_DIM)


def init_params(key, input_dim, hidden_dim1, hidden_dim2):
    """Deterministic init. Weights stored as (in_features, out_features)."""
    ks = jax.random.split(key, 6)

    def uniform_init(k, shape, fan_in):
        bound = 1.0 / jnp.sqrt(jnp.float32(fan_in))
        return jax.random.uniform(k, shape, jnp.float32, -bound, bound)

    return {
        "w1": uniform_init(ks[0], (input_dim, hidden_dim1), input_dim),
        "b1": uniform_init(ks[1], (1, hidden_dim1), input_dim),
        "w2": uniform_init(ks[2], (hidden_dim1, hidden_dim2), hidden_dim1),
        "b2": uniform_init(ks[3], (1, hidden_dim2), hidden_dim1),
        "w3": uniform_init(ks[4], (hidden_dim2, OUT_DIM), hidden_dim2),
        "b3": uniform_init(ks[5], (1, OUT_DIM), hidden_dim2),
    }


def reference_forward(x, p):
    h1 = jnp.maximum(x @ p["w1"] + p["b1"], 0.0)
    h2 = jnp.maximum(h1 @ p["w2"] + p["b2"], 0.0)
    return h2 @ p["w3"] + p["b3"]


if __name__ == "__main__":
    key = jax.random.PRNGKey(0)
    k_x, k_p = jax.random.split(key)

    params = init_params(k_p, INPUT_DIM, HIDDEN_DIM1, HIDDEN_DIM2)
    packed = pack_params(params)

    # Small single-block case.
    batch = 8
    x = jax.random.normal(k_x, (batch, INPUT_DIM), jnp.float32)
    out = jax.block_until_ready(regression_nn_forward(x, packed))
    ref = reference_forward(x, params)
    assert out.shape == (batch, OUT_DIM), out.shape
    # bf16 matmul operands with f32 accumulation -> loosened tolerance.
    assert jnp.allclose(out, ref, atol=3e-2, rtol=3e-2), (
        "mismatch vs reference", float(jnp.max(jnp.abs(out - ref))))

    # Multi-block / padded-batch path (2 parallel grid blocks).
    batch2 = 300
    x2 = jax.random.normal(k_x, (batch2, INPUT_DIM), jnp.float32)
    out2 = jax.block_until_ready(regression_nn_forward(x2, packed))
    ref2 = reference_forward(x2, params)
    assert out2.shape == (batch2, OUT_DIM), out2.shape
    assert jnp.allclose(out2, ref2, atol=3e-2, rtol=3e-2), (
        "mismatch vs reference (multi-block)", float(jnp.max(jnp.abs(out2 - ref2))))

    print("KERNEL_OK")
</pallas_src>

<mosaic_0001>
module attributes {stable_mosaic.version = 11 : i64} {
  func.func @_mlp_kernel(%arg0: i32, %arg1: memref<16x128xf32, #tpu.memory_space<vmem>>, %arg2: memref<384x128xbf16, #tpu.memory_space<vmem>>, %arg3: memref<2x128xf32, #tpu.memory_space<vmem>>, %arg4: memref<1xf32, #tpu.memory_space<smem>>, %arg5: memref<16x128xf32, #tpu.memory_space<vmem>>) attributes {dimension_semantics = [#tpu.dimension_semantics<parallel>], iteration_bounds = array<i64: 1>, scalar_prefetch = 0 : i64, scratch_operands = 0 : i64, tpu.core_type = #tpu.core_type<tc>, window_params = [{transform_indices = @transform_0, window_bounds = array<i64: 16, 128>}, {pipeline_mode = #tpu.pipeline_mode<synchronous>, transform_indices = @transform_1, window_bounds = array<i64: 384, 128>}, {pipeline_mode = #tpu.pipeline_mode<synchronous>, transform_indices = @transform_2, window_bounds = array<i64: 2, 128>}, {transform_indices = @transform_3, window_bounds = array<i64: 1>}, {transform_indices = @transform_4, window_bounds = array<i64: 16, 128>}]} {
    %c0 = arith.constant 0 : index
    %c0_0 = arith.constant 0 : index
    %0 = vector.load %arg1[%c0, %c0_0] : memref<16x128xf32, #tpu.memory_space<vmem>>, vector<16x128xf32>
    %1 = arith.truncf %0 : vector<16x128xf32> to vector<16x128xbf16>
    %c0_1 = arith.constant 0 : index
    %c0_2 = arith.constant 0 : index
    %2 = vector.load %arg2[%c0_1, %c0_2] : memref<384x128xbf16, #tpu.memory_space<vmem>>, vector<128x128xbf16>
    %cst = arith.constant dense<0.000000e+00> : vector<16x128xf32>
    %3 = tpu.matmul %1, %2, %cst {dimension_numbers = #tpu.dot_dimension_numbers<[1], [0], [0], [1], [0, 0, 1, 1], [], []>} : vector<16x128xbf16>, vector<128x128xbf16>, vector<16x128xf32> -> vector<16x128xf32>
    %c0_3 = arith.constant 0 : index
    %c0_4 = arith.constant 0 : index
    %4 = vector.load %arg3[%c0_3, %c0_4] : memref<2x128xf32, #tpu.memory_space<vmem>>, vector<1x128xf32>
    %5 = vector.broadcast %4 : vector<1x128xf32> to vector<16x128xf32>
    %6 = arith.addf %3, %5 : vector<16x128xf32>
    %cst_5 = arith.constant 0.000000e+00 : f32
    %7 = vector.broadcast %cst_5 : f32 to vector<16x128xf32>
    %8 = arith.maximumf %6, %7 : vector<16x128xf32>
    %9 = arith.truncf %8 : vector<16x128xf32> to vector<16x128xbf16>
    %c128 = arith.constant 128 : index
    %c0_6 = arith.constant 0 : index
    %10 = vector.load %arg2[%c128, %c0_6] : memref<384x128xbf16, #tpu.memory_space<vmem>>, vector<128x128xbf16>
    %cst_7 = arith.constant dense<0.000000e+00> : vector<16x128xf32>
    %11 = tpu.matmul %9, %10, %cst_7 {dimension_numbers = #tpu.dot_dimension_numbers<[1], [0], [0], [1], [0, 0, 1, 1], [], []>} : vector<16x128xbf16>, vector<128x128xbf16>, vector<16x128xf32> -> vector<16x128xf32>
    %c1 = arith.constant 1 : index
    %c0_8 = arith.constant 0 : index
    %12 = vector.load %arg3[%c1, %c0_8] : memref<2x128xf32, #tpu.memory_space<vmem>>, vector<1x128xf32>
    %13 = vector.broadcast %12 : vector<1x128xf32> to vector<16x128xf32>
    %14 = arith.addf %11, %13 : vector<16x128xf32>
    %cst_9 = arith.constant 0.000000e+00 : f32
    %15 = vector.broadcast %cst_9 : f32 to vector<16x128xf32>
    %16 = arith.maximumf %14, %15 : vector<16x128xf32>
    %17 = arith.truncf %16 : vector<16x128xf32> to vector<16x128xbf16>
    %c256 = arith.constant 256 : index
    %c0_10 = arith.constant 0 : index
    %18 = vector.load %arg2[%c256, %c0_10] : memref<384x128xbf16, #tpu.memory_space<vmem>>, vector<128x128xbf16>
    %cst_11 = arith.constant dense<0.000000e+00> : vector<16x128xf32>
    %19 = tpu.matmul %17, %18, %cst_11 {dimension_numbers = #tpu.dot_dimension_numbers<[1], [0], [0], [1], [0, 0, 1, 1], [], []>} : vector<16x128xbf16>, vector<128x128xbf16>, vector<16x128xf32> -> vector<16x128xf32>
    %c0_12 = arith.constant 0 : index
    %20 = memref.load %arg4[%c0_12] : memref<1xf32, #tpu.memory_space<smem>>
    %21 = vector.broadcast %20 : f32 to vector<16x128xf32>
    %22 = arith.addf %19, %21 : vector<16x128xf32>
    %c0_13 = arith.constant 0 : index
    %c0_14 = arith.constant 0 : index
    %23 = vector.load %arg5[%c0_13, %c0_14] : memref<16x128xf32, #tpu.memory_space<vmem>>, vector<16x128xf32>
    tpu.vector_store %arg5[%c0_13, %c0_14], %22 {strides = array<i32>} : memref<16x128xf32, #tpu.memory_space<vmem>>, vector<16x128xf32>,
    return
  }
  func.func @transform_0(%arg0: i32) -> (i32, i32) {
    %c0_i32 = arith.constant 0 : i32
    %c0_i32_0 = arith.constant 0 : i32
    return %arg0, %c0_i32 : i32, i32
  }
  func.func @transform_1(%arg0: i32) -> (i32, i32) {
    %c0_i32 = arith.constant 0 : i32
    %c0_i32_0 = arith.constant 0 : i32
    %c0_i32_1 = arith.constant 0 : i32
    return %c0_i32, %c0_i32_0 : i32, i32
  }
  func.func @transform_2(%arg0: i32) -> (i32, i32) {
    %c0_i32 = arith.constant 0 : i32
    %c0_i32_0 = arith.constant 0 : i32
    %c0_i32_1 = arith.constant 0 : i32
    return %c0_i32, %c0_i32_0 : i32, i32
  }
  func.func @transform_3(%arg0: i32) -> i32 {
    %c0_i32 = arith.constant 0 : i32
    %c0_i32_0 = arith.constant 0 : i32
    return %c0_i32 : i32
  }
  func.func @transform_4(%arg0: i32) -> (i32, i32) {
    %c0_i32 = arith.constant 0 : i32
    %c0_i32_0 = arith.constant 0 : i32
    return %arg0, %c0_i32 : i32, i32
  }
}

</mosaic_0001>

<llo_original>
// kernel: tpu_custom_call.1
$region0: #{tpu_custom_call.1}
  #allocation0 [shape = 'u32[]', space=smem, size = 0x4, offset = 0x4, fixed_abs, tag = 'smem constant byte address 0x4 - core index']
  #allocation1 [shape = 'u32[144,128]{1,0:T(1,128)}', space=vmem, size = 0x12000, scoped, tag = 'internal scratch']
  #allocation2 [shape = 'f32[1]{0:T(128)S(6)}', space=smem, size = 0x200, scoped, tag = 'scoped memory for tpu_custom_call.1']
  %s0 = inlined_call_operand.hbm [shape: f32[16,128], index: 0, kind: input, shape index: {}]
  %s1 = inlined_call_operand.hbm [shape: bf16[384,128], index: 1, kind: input, shape index: {}]
  %s2 = inlined_call_operand.vmem [shape: f32[2,128], index: 2, kind: input, shape index: {}]
  %s3 = inlined_call_operand.<no memory space> [shape: f32[1], index: 3, kind: input, shape index: {}]
  %s4 = inlined_call_operand.hbm [shape: f32[16,128], index: 4, kind: output, shape index: {}]
  %s5 = sld [smem:[#allocation0]]
  $region34: #{tpu_custom_call.1} parent=0
    _
  %s7 = ssub.s32 1, %s5
  %s8 = scalar_select 0, %s7, %s5
  %9 = sst [smem:[#allocation2]] %s3
  $region1: #{tpu_custom_call.1} parent=0
    #allocation3 [shape = 'u8[8192]{0}', space=vmem, size = 0x2000, scoped, tag = 'input window, operand 0, single buffered']
    #allocation4 [shape = 's32[1]{0}', space=sflag, size = 0x4, scoped, tag = 'scoped memory for tpu_custom_call.1']
    #allocation5 [shape = 's32[1]{0}', space=sflag, size = 0x4, scoped, tag = 'scoped memory for tpu_custom_call.1']
    #allocation6 [shape = 'u8[98304]{0}', space=vmem, size = 0x18000, scoped, tag = 'input window, operand 1, single buffered']
    #allocation7 [shape = 's32[1]{0}', space=sflag, size = 0x4, scoped, tag = 'scoped memory for tpu_custom_call.1']
    #allocation8 [shape = 'u8[8192]{0}', space=vmem, size = 0x2000, scoped, tag = 'output window, operand 0, single buffered']
    %10 = vsyncpa [#allocation4], 0
    %11 = vsyncpa [#allocation7], 0
    %12 = vsyncpa [#allocation5], 0
    // Predicated region
    $region2: #{tpu_custom_call.1} parent=1 // pred_check
      _
    $region3: #{tpu_custom_call.1} parent=1 // pred_check_branch
      %14 = sbr.rel (0) target = $region5
    $region4: #{tpu_custom_call.1} parent=1 // pred_region
      %s16 = ssub.s32 256, 256
      %17 = vsyncadd [#allocation4], %s16
      %s18 = sshll.u32 [#allocation3], 4
      %s19 = int_to_ptr.vmem [resolvable:$true] %s18
      %24 = dma.hbm_to_vmem [thread:$0]  %s0, 256, %s19, [#allocation4], 128, 128, 8
    $region5: #{tpu_custom_call.1} parent=1 // pred_fallthru
      _
    // Predicated region
    $region6: #{tpu_custom_call.1} parent=1 // pred_check
      _
    $region7: #{tpu_custom_call.1} parent=1 // pred_check_branch
      %26 = sbr.rel (0) target = $region9
    $region8: #{tpu_custom_call.1} parent=1 // pred_region
      %s28 = ssub.s32 3072, 3072
      %29 = vsyncadd [#allocation7], %s28
      %s30 = sshll.u32 [#allocation6], 4
      %s31 = int_to_ptr.vmem [resolvable:$true] %s30
      %36 = dma.hbm_to_vmem [thread:$0]  %s1, 3072, %s31, [#allocation7], 64, 64, 4
    $region9: #{tpu_custom_call.1} parent=1 // pred_fallthru
      _
    // Predicated region
    $region10: #{tpu_custom_call.1} parent=1 // pred_check
      _
    $region11: #{tpu_custom_call.1} parent=1 // pred_check_branch
      %38 = sbr.rel (0) target = $region13
    $region12: #{tpu_custom_call.1} parent=1 // pred_region
      _
    $region13: #{tpu_custom_call.1} parent=1 // pred_fallthru
      _
    // Predicated region
    $region14: #{tpu_custom_call.1} parent=1 // pred_check
      _
    $region15: #{tpu_custom_call.1} parent=1 // pred_check_branch
      %40 = sbr.rel (0) target = $region17
    $region16: #{tpu_custom_call.1} parent=1 // pred_region
      _
    $region17: #{tpu_custom_call.1} parent=1 // pred_fallthru
      _
    // Predicated region
    $region18: #{tpu_custom_call.1} parent=1 // pred_check
      _
    $region19: #{tpu_custom_call.1} parent=1 // pred_check_branch
      %42 = sbr.rel (0) target = $region21
    $region20: #{tpu_custom_call.1} parent=1 // pred_region
      %43 = dma.done [#allocation4], 256
    $region21: #{tpu_custom_call.1} parent=1 // pred_fallthru
      _
    // Predicated region
    $region22: #{tpu_custom_call.1} parent=1 // pred_check
      _
    $region23: #{tpu_custom_call.1} parent=1 // pred_check_branch
      %45 = sbr.rel (0) target = $region25
    $region24: #{tpu_custom_call.1} parent=1 // pred_region
      %46 = dma.done [#allocation7], 3072
    $region25: #{tpu_custom_call.1} parent=1 // pred_fallthru
      _
    %v48 = vld [vmem:[#allocation3] sm:$0xff]
    %v49 = vld [vmem:[#allocation3 + $0x8] sm:$0xff]
    %v50 = vpack.c.bf16 %v49, %v48
    %v51 = vld [vmem:[#allocation6] sm:$0xf]
    %v52 = vld [vmem:[#allocation6 + $0x4] sm:$0xf]
    %v53 = vld [vmem:[#allocation6 + $0x8] sm:$0xf]
    %v54 = vld [vmem:[#allocation6 + $0xc] sm:$0xf]
    %v55 = vld [vmem:[#allocation6 + $0x10] sm:$0xf]
    %v56 = vld [vmem:[#allocation6 + $0x14] sm:$0xf]
    %v57 = vld [vmem:[#allocation6 + $0x18] sm:$0xf]
    %v58 = vld [vmem:[#allocation6 + $0x1c] sm:$0xf]
    %v59 = vld [vmem:[#allocation6 + $0x20] sm:$0xf]
    %v60 = vld [vmem:[#allocation6 + $0x24] sm:$0xf]
    %v61 = vld [vmem:[#allocation6 + $0x28] sm:$0xf]
    %v62 = vld [vmem:[#allocation6 + $0x2c] sm:$0xf]
    %v63 = vld [vmem:[#allocation6 + $0x30] sm:$0xf]
    %v64 = vld [vmem:[#allocation6 + $0x34] sm:$0xf]
    %v65 = vld [vmem:[#allocation6 + $0x38] sm:$0xf]
    %v66 = vld [vmem:[#allocation6 + $0x3c] sm:$0xf]
    %v67 = vld [vmem:[%s2] sm:$0x1]
    %v68 = vlaneseq
    %v69 = vshrl.u32 %v68, 7
    %v70 = vsub.s32 0, %v69
    %v71 = vrot.slane %v67, %v70
    %v88 = vunpack.c.l.b16 %v51
    %v89 = vunpack.c.l.b16 %v52
    %v90 = vunpack.c.l.b16 %v53
    %v91 = vunpack.c.l.b16 %v54
    %v92 = vunpack.c.l.b16 %v55
    %v93 = vunpack.c.l.b16 %v56
    %v94 = vunpack.c.l.b16 %v57
    %v95 = vunpack.c.l.b16 %v58
    %v96 = vunpack.c.l.b16 %v59
    %v97 = vunpack.c.l.b16 %v60
    %v98 = vunpack.c.l.b16 %v61
    %v99 = vunpack.c.l.b16 %v62
    %v100 = vunpack.c.l.b16 %v63
    %v101 = vunpack.c.l.b16 %v64
    %v102 = vunpack.c.l.b16 %v65
    %v103 = vunpack.c.l.b16 %v66
    %v104 = vpack.c.b16 %v89, %v88
    %v105 = vpack.c.b16 %v91, %v90
    %v106 = vpack.c.b16 %v93, %v92
    %v107 = vpack.c.b16 %v95, %v94
    %v108 = vpack.c.b16 %v97, %v96
    %v109 = vpack.c.b16 %v99, %v98
    %v110 = vpack.c.b16 %v101, %v100
    %v111 = vpack.c.b16 %v103, %v102
    %120 = vmatprep.subr.bf16.mxu0 0
    %121 = vmatpush1.bf16.msra.mxu0 %v104
    %122 = vmatprep.subr.bf16.mxu0 0
    %123 = vmatpush1.bf16.msra.mxu0 %v105
    %124 = vmatprep.subr.bf16.mxu0 0
    %125 = vmatpush1.bf16.msra.mxu0 %v106
    %126 = vmatprep.subr.bf16.mxu0 0
    %127 = vmatpush1.bf16.msra.mxu0 %v107
    %128 = vmatprep.subr.bf16.mxu0 0
    %129 = vmatpush1.bf16.msra.mxu0 %v108
    %130 = vmatprep.subr.bf16.mxu0 0
    %131 = vmatpush1.bf16.msra.mxu0 %v109
    %132 = vmatprep.subr.bf16.mxu0 0
    %133 = vmatpush1.bf16.msra.mxu0 %v110
    %134 = vmatprep.subr.bf16.mxu0 0
    %135 = vmatpush1.bf16.msra.mxu0 %v111
    %136 = vmatprep.subr.bf16.mxu0 0
    %137 = vmatpush1.bf16.msra.mxu0 0
    %138 = vmatprep.subr.bf16.mxu0 0
    %139 = vmatpush1.bf16.msra.mxu0 0
    %140 = vmatprep.subr.bf16.mxu0 0
    %141 = vmatpush1.bf16.msra.mxu0 0
    %142 = vmatprep.subr.bf16.mxu0 0
    %143 = vmatpush1.bf16.msra.mxu0 0
    %144 = vmatprep.subr.bf16.mxu0 0
    %145 = vmatpush1.bf16.msra.mxu0 0
    %146 = vmatprep.subr.bf16.mxu0 0
    %147 = vmatpush1.bf16.msra.mxu0 0
    %148 = vmatprep.subr.bf16.mxu0 0
    %149 = vmatpush1.bf16.msra.mxu0 0
    %150 = vmatprep.subr.bf16.mxu0 0
    %151 = vmatpush1.bf16.msra.mxu0 0
    %152 = vmatprep.mubr.bf16.mxu0 0
    %153 = vmatmul.mubr.bf16.gmra.mrb[0].mxu0 %v50
    %v154 = vpop.f32.mrb[0].mxu0
    %v155 = vadd.f32 %v71, %v154
    %v156 = vpop.f32.mrb[0].mxu0
    %v157 = vpop.f32.mrb[0].mxu0
    %v158 = vadd.f32 %v71, %v157
    %v159 = vpop.f32.mrb[0].mxu0
    %160 = vdwg.mxu0
    %v161 = vmax.f32 %v155, 0.0
    %v162 = vmax.f32 %v158, 0.0
    %v163 = vpack.c.bf16 %v162, %v161
    %v164 = vld [vmem:[#allocation6 + $0x40] sm:$0xf]
    %v165 = vld [vmem:[#allocation6 + $0x44] sm:$0xf]
    %v166 = vld [vmem:[#allocation6 + $0x48] sm:$0xf]
    %v167 = vld [vmem:[#allocation6 + $0x4c] sm:$0xf]
    %v168 = vld [vmem:[#allocation6 + $0x50] sm:$0xf]
    %v169 = vld [vmem:[#allocation6 + $0x54] sm:$0xf]
    %v170 = vld [vmem:[#allocation6 + $0x58] sm:$0xf]
    %v171 = vld [vmem:[#allocation6 + $0x5c] sm:$0xf]
    %v172 = vld [vmem:[#allocation6 + $0x60] sm:$0xf]
    %v173 = vld [vmem:[#allocation6 + $0x64] sm:$0xf]
    %v174 = vld [vmem:[#allocation6 + $0x68] sm:$0xf]
    %v175 = vld [vmem:[#allocation6 + $0x6c] sm:$0xf]
    %v176 = vld [vmem:[#allocation6 + $0x70] sm:$0xf]
    %v177 = vld [vmem:[#allocation6 + $0x74] sm:$0xf]
    %v178 = vld [vmem:[#allocation6 + $0x78] sm:$0xf]
    %v179 = vld [vmem:[#allocation6 + $0x7c] sm:$0xf]
    %v180 = vld [vmem:[%s2 + $0x1] sm:$0x1]
    %v181 = vlaneseq
    %v182 = vshrl.u32 %v181, 7
    %v183 = vsub.s32 0, %v182
    %v184 = vrot.slane %v180, %v183
    %v201 = vunpack.c.l.b16 %v164
    %v202 = vunpack.c.l.b16 %v165
    %v203 = vunpack.c.l.b16 %v166
    %v204 = vunpack.c.l.b16 %v167
    %v205 = vunpack.c.l.b16 %v168
    %v206 = vunpack.c.l.b16 %v169
    %v207 = vunpack.c.l.b16 %v170
    %v208 = vunpack.c.l.b16 %v171
    %v209 = vunpack.c.l.b16 %v172
    %v210 = vunpack.c.l.b16 %v173
    %v211 = vunpack.c.l.b16 %v174
    %v212 = vunpack.c.l.b16 %v175
    %v213 = vunpack.c.l.b16 %v176
    %v214 = vunpack.c.l.b16 %v177
    %v215 = vunpack.c.l.b16 %v178
    %v216 = vunpack.c.l.b16 %v179
    %v217 = vpack.c.b16 %v202, %v201
    %v218 = vpack.c.b16 %v204, %v203
    %v219 = vpack.c.b16 %v206, %v205
    %v220 = vpack.c.b16 %v208, %v207
    %v221 = vpack.c.b16 %v210, %v209
    %v222 = vpack.c.b16 %v212, %v211
    %v223 = vpack.c.b16 %v214, %v213
    %v224 = vpack.c.b16 %v216, %v215
    %233 = vmatprep.subr.bf16.mxu0 0
    %234 = vmatpush1.bf16.msra.mxu0 %v217
    %235 = vmatprep.subr.bf16.mxu0 0
    %236 = vmatpush1.bf16.msra.mxu0 %v218
    %237 = vmatprep.subr.bf16.mxu0 0
    %238 = vmatpush1.bf16.msra.mxu0 %v219
    %239 = vmatprep.subr.bf16.mxu0 0
    %240 = vmatpush1.bf16.msra.mxu0 %v220
    %241 = vmatprep.subr.bf16.mxu0 0
    %242 = vmatpush1.bf16.msra.mxu0 %v221
    %243 = vmatprep.subr.bf16.mxu0 0
    %244 = vmatpush1.bf16.msra.mxu0 %v222
    %245 = vmatprep.subr.bf16.mxu0 0
    %246 = vmatpush1.bf16.msra.mxu0 %v223
    %247 = vmatprep.subr.bf16.mxu0 0
    %248 = vmatpush1.bf16.msra.mxu0 %v224
    %249 = vmatprep.subr.bf16.mxu0 0
    %250 = vmatpush1.bf16.msra.mxu0 0
    %251 = vmatprep.subr.bf16.mxu0 0
    %252 = vmatpush1.bf16.msra.mxu0 0
    %253 = vmatprep.subr.bf16.mxu0 0
    %254 = vmatpush1.bf16.msra.mxu0 0
    %255 = vmatprep.subr.bf16.mxu0 0
    %256 = vmatpush1.bf16.msra.mxu0 0
    %257 = vmatprep.subr.bf16.mxu0 0
    %258 = vmatpush1.bf16.msra.mxu0 0
    %259 = vmatprep.subr.bf16.mxu0 0
    %260 = vmatpush1.bf16.msra.mxu0 0
    %261 = vmatprep.subr.bf16.mxu0 0
    %262 = vmatpush1.bf16.msra.mxu0 0
    %263 = vmatprep.subr.bf16.mxu0 0
    %264 = vmatpush1.bf16.msra.mxu0 0
    %265 = vmatprep.mubr.bf16.mxu0 0
    %266 = vmatmul.mubr.bf16.gmra.mrb[0].mxu0 %v163
    %v267 = vpop.f32.mrb[0].mxu0
    %v268 = vadd.f32 %v184, %v267
    %v269 = vpop.f32.mrb[0].mxu0
    %v270 = vpop.f32.mrb[0].mxu0
    %v271 = vadd.f32 %v184, %v270
    %v272 = vpop.f32.mrb[0].mxu0
    %273 = vdwg.mxu0
    %v274 = vmax.f32 %v268, 0.0
    %v275 = vmax.f32 %v271, 0.0
    %v276 = vpack.c.bf16 %v275, %v274
    %v277 = vld [vmem:[#allocation6 + $0x80] sm:$0xf]
    %v278 = vld [vmem:[#allocation6 + $0x84] sm:$0xf]
    %v279 = vld [vmem:[#allocation6 + $0x88] sm:$0xf]
    %v280 = vld [vmem:[#allocation6 + $0x8c] sm:$0xf]
    %v281 = vld [vmem:[#allocation6 + $0x90] sm:$0xf]
    %v282 = vld [vmem:[#allocation6 + $0x94] sm:$0xf]
    %v283 = vld [vmem:[#allocation6 + $0x98] sm:$0xf]
    %v284 = vld [vmem:[#allocation6 + $0x9c] sm:$0xf]
    %v285 = vld [vmem:[#allocation6 + $0xa0] sm:$0xf]
    %v286 = vld [vmem:[#allocation6 + $0xa4] sm:$0xf]
    %v287 = vld [vmem:[#allocation6 + $0xa8] sm:$0xf]
    %v288 = vld [vmem:[#allocation6 + $0xac] sm:$0xf]
    %v289 = vld [vmem:[#allocation6 + $0xb0] sm:$0xf]
    %v290 = vld [vmem:[#allocation6 + $0xb4] sm:$0xf]
    %v291 = vld [vmem:[#allocation6 + $0xb8] sm:$0xf]
    %v292 = vld [vmem:[#allocation6 + $0xbc] sm:$0xf]
    %s293 = sld [smem:[#allocation2]]
    %v294 = vstv %s293
    %v311 = vunpack.c.l.b16 %v277
    %v312 = vunpack.c.l.b16 %v278
    %v313 = vunpack.c.l.b16 %v279
    %v314 = vunpack.c.l.b16 %v280
    %v315 = vunpack.c.l.b16 %v281
    %v316 = vunpack.c.l.b16 %v282
    %v317 = vunpack.c.l.b16 %v283
    %v318 = vunpack.c.l.b16 %v284
    %v319 = vunpack.c.l.b16 %v285
    %v320 = vunpack.c.l.b16 %v286
    %v321 = vunpack.c.l.b16 %v287
    %v322 = vunpack.c.l.b16 %v288
    %v323 = vunpack.c.l.b16 %v289
    %v324 = vunpack.c.l.b16 %v290
    %v325 = vunpack.c.l.b16 %v291
    %v326 = vunpack.c.l.b16 %v292
    %v327 = vpack.c.b16 %v312, %v311
    %v328 = vpack.c.b16 %v314, %v313
    %v329 = vpack.c.b16 %v316, %v315
    %v330 = vpack.c.b16 %v318, %v317
    %v331 = vpack.c.b16 %v320, %v319
    %v332 = vpack.c.b16 %v322, %v321
    %v333 = vpack.c.b16 %v324, %v323
    %v334 = vpack.c.b16 %v326, %v325
    %343 = vmatprep.subr.bf16.mxu0 0
    %344 = vmatpush1.bf16.msra.mxu0 %v327
    %345 = vmatprep.subr.bf16.mxu0 0
    %346 = vmatpush1.bf16.msra.mxu0 %v328
    %347 = vmatprep.subr.bf16.mxu0 0
    %348 = vmatpush1.bf16.msra.mxu0 %v329
    %349 = vmatprep.subr.bf16.mxu0 0
    %350 = vmatpush1.bf16.msra.mxu0 %v330
    %351 = vmatprep.subr.bf16.mxu0 0
    %352 = vmatpush1.bf16.msra.mxu0 %v331
    %353 = vmatprep.subr.bf16.mxu0 0
    %354 = vmatpush1.bf16.msra.mxu0 %v332
    %355 = vmatprep.subr.bf16.mxu0 0
    %356 = vmatpush1.bf16.msra.mxu0 %v333
    %357 = vmatprep.subr.bf16.mxu0 0
    %358 = vmatpush1.bf16.msra.mxu0 %v334
    %359 = vmatprep.subr.bf16.mxu0 0
    %360 = vmatpush1.bf16.msra.mxu0 0
    %361 = vmatprep.subr.bf16.mxu0 0
    %362 = vmatpush1.bf16.msra.mxu0 0
    %363 = vmatprep.subr.bf16.mxu0 0
    %364 = vmatpush1.bf16.msra.mxu0 0
    %365 = vmatprep.subr.bf16.mxu0 0
    %366 = vmatpush1.bf16.msra.mxu0 0
    %367 = vmatprep.subr.bf16.mxu0 0
    %368 = vmatpush1.bf16.msra.mxu0 0
    %369 = vmatprep.subr.bf16.mxu0 0
    %370 = vmatpush1.bf16.msra.mxu0 0
    %371 = vmatprep.subr.bf16.mxu0 0
    %372 = vmatpush1.bf16.msra.mxu0 0
    %373 = vmatprep.subr.bf16.mxu0 0
    %374 = vmatpush1.bf16.msra.mxu0 0
    %375 = vmatprep.mubr.bf16.mxu0 0
    %376 = vmatmul.mubr.bf16.gmra.mrb[0].mxu0 %v276
    %v377 = vpop.f32.mrb[0].mxu0
    %v378 = vadd.f32 %v294, %v377
    %v379 = vpop.f32.mrb[0].mxu0
    %v380 = vpop.f32.mrb[0].mxu0
    %v381 = vadd.f32 %v294, %v380
    %v382 = vpop.f32.mrb[0].mxu0
    %383 = vdwg.mxu0
    %384 = vst [vmem:[#allocation8] sm:$0xff] %v378
    %385 = vst [vmem:[#allocation8 + $0x8] sm:$0xff] %v381
    // Predicated region
    $region26: #{tpu_custom_call.1} parent=1 // pred_check
      _
    $region27: #{tpu_custom_call.1} parent=1 // pred_check_branch
      %387 = sbr.rel (0) target = $region29
    $region28: #{tpu_custom_call.1} parent=1 // pred_region
      %s389 = ssub.s32 256, 256
      %390 = vsyncadd [#allocation5], %s389
      %s391 = sshll.u32 [#allocation8], 4
      %s392 = int_to_ptr.vmem [resolvable:$true] %s391
      %397 = dma.vmem_to_hbm [thread:$0]  %s392, 256, %s4, [#allocation5], 128, 128, 8
    $region29: #{tpu_custom_call.1} parent=1 // pred_fallthru
      _
    // Predicated region
    $region30: #{tpu_custom_call.1} parent=1 // pred_check
      _
    $region31: #{tpu_custom_call.1} parent=1 // pred_check_branch
      %399 = sbr.rel (0) target = $region33
    $region32: #{tpu_custom_call.1} parent=1 // pred_region
      %400 = dma.done [#allocation5], 256
    $region33: #{tpu_custom_call.1} parent=1 // pred_fallthru
      _
    %401 = vsyncpa [#allocation4], 1
    %402 = vsyncpa [#allocation7], 1
    %403 = vsyncpa [#allocation5], 1

</llo_original>
